<compile_context>
chip_gen: v7x
topology: tpu7x:2x2x1
jax: 0.10.0
libtpu: 0.0.40
codegen_flags: <defaults>
</compile_context>

<pallas_src>
import functools

import jax
import jax.numpy as jnp
import numpy as np
from jax.experimental import pallas as pl
from jax.experimental.pallas import tpu as pltpu


def _spike_kernel(th_in_ref, th_out_ref, x_ref, out_ref, mem_ref, *, T, TT):
    """One grid step = one (feature chunk, time block) pair.

    th_in_ref / th_out_ref : SMEM (T,) f32 scalar-prefetch thresholds
    x_ref                  : VMEM (B, TT, tile_R, L) f32 input block
    out_ref                : VMEM (B, TT, tile_R, L) f32 spike output block
    mem_ref                : VMEM (B, tile_R, L) f32 carried membrane potential
    """
    tb = pl.program_id(1)                      # time-block index (inner, sequential axis)

    @pl.when(tb == 0)
    def _():                                   # reset membrane at the start of each chunk's scan
        mem_ref[...] = jnp.zeros_like(mem_ref)

    Tf = jnp.float32(T)                        # `const` passed to SpikeAct is T
    mem = mem_ref[...]
    for i in range(TT):                        # static micro-loop over the time batch
        t = tb * TT + i
        mem = mem + x_ref[:, i]
        thr = th_in_ref[t] * Tf                # firing threshold for this timestep
        amp = th_out_ref[t] * Tf               # spike amplitude for this timestep
        spike = jnp.where(mem >= thr, amp, jnp.float32(0.0))
        out_ref[:, i] = spike
        mem = mem - spike                      # soft reset (const == 1)
    mem_ref[...] = mem


def _choose_tiling(B, T, R, L, target_block_bytes=1 << 20, tt_cap=16):
    """Pick (tile_R, TT): tile_R a multiple of 8 dividing R, TT a divisor of T,
    such that one (B, TT, tile_R, L) block stays within ~target_block_bytes."""
    bytes_per_row = B * L * 4
    max_rows = max(1, target_block_bytes // bytes_per_row)
    if R % 8 == 0:
        tile_r = 8
        for cand in range(8, R + 1, 8):
            if R % cand == 0 and cand <= max_rows:
                tile_r = cand
    else:
        tile_r = R                              # full dim (still legal: equals array dim)
    block_bytes = B * tile_r * L * 4
    tt = 1
    for cand in range(1, min(T, tt_cap) + 1):
        if T % cand == 0 and cand * block_bytes <= target_block_bytes:
            tt = cand
    return tile_r, tt


def spike_layer(x, thresh_inner, thresh_outer):
    """x: (B, T, C, H, W) f32.  thresh_inner/outer: (T,) f32.  Returns (B, T, C, H, W) f32."""
    B, T, C, H, W = x.shape
    N = C * H * W
    LANE = 128
    if N % LANE == 0:
        R, L = N // LANE, LANE                  # lane-dense, 8-aligned feature rows
    else:
        R, L = C, H * W                         # fallback: full-dim block (weaker packing)
    x_r = x.reshape(B, T, R, L)                 # free reshape — no transpose, no extra HBM pass

    tile_R, TT = _choose_tiling(B, T, R, L)
    grid = (R // tile_R, T // TT)               # (feature chunks [parallel], time blocks [arbitrary])

    kernel = functools.partial(_spike_kernel, T=T, TT=TT)

    out = pl.pallas_call(
        kernel,
        out_shape=jax.ShapeDtypeStruct((B, T, R, L), jnp.float32),
        grid_spec=pltpu.PrefetchScalarGridSpec(
            num_scalar_prefetch=2,              # thresh_inner, thresh_outer -> SMEM
            grid=grid,
            in_specs=[
                pl.BlockSpec((B, TT, tile_R, L), lambda c, tb, thi, tho: (0, tb, c, 0)),
            ],
            out_specs=pl.BlockSpec((B, TT, tile_R, L), lambda c, tb, thi, tho: (0, tb, c, 0)),
            scratch_shapes=[pltpu.VMEM((B, tile_R, L), jnp.float32)],   # carried membrane
        ),
        compiler_params=pltpu.CompilerParams(
            dimension_semantics=("parallel", "arbitrary"),  # time scan must stay innermost
            vmem_limit_bytes=32 * 1024 * 1024,
        ),
    )(thresh_inner, thresh_outer, x_r)

    return out.reshape(B, T, C, H, W)           # free reshape back


def spike_layer_ref(x, thresh_inner, thresh_outer):
    """Pure-JAX reference mirroring the PyTorch loop."""
    T = x.shape[1]
    Tf = jnp.float32(T)
    mem = jnp.zeros_like(x[:, 0])
    outs = []
    for t in range(T):
        mem = mem + x[:, t]
        fire = (mem >= thresh_inner[t] * Tf).astype(jnp.float32)
        spike = fire * thresh_outer[t] * Tf
        mem = mem - spike
        outs.append(spike)
    return jnp.stack(outs, axis=1)


if __name__ == "__main__":
    B, T, C, H, W = 2, 8, 4, 16, 16

    key = jax.random.PRNGKey(0)
    kx, _ = jax.random.split(key)
    x = jax.random.normal(kx, (B, T, C, H, W), dtype=jnp.float32)

    # Deterministic per-timestep thresholds (module __init__ takes these as args).
    thresh_inner = 0.05 + 0.02 * jnp.arange(T, dtype=jnp.float32)
    thresh_outer = 0.10 + 0.01 * jnp.arange(T, dtype=jnp.float32)

    out = spike_layer(x, thresh_inner, thresh_outer)
    out = jax.block_until_ready(out)

    ref = spike_layer_ref(x, thresh_inner, thresh_outer)
    np.testing.assert_allclose(np.asarray(out), np.asarray(ref), rtol=1e-6, atol=1e-6)

    print("KERNEL_OK")
</pallas_src>

<mosaic_0001>
module attributes {stable_mosaic.version = 11 : i64} {
  func.func @_spike_kernel(%arg0: i32, %arg1: i32, %arg2: memref<8xf32, #tpu.memory_space<smem>>, %arg3: memref<8xf32, #tpu.memory_space<smem>>, %arg4: memref<2x8x8x128xf32, #tpu.memory_space<vmem>>, %arg5: memref<2x8x8x128xf32, #tpu.memory_space<vmem>>, %arg6: memref<2x8x128xf32, #tpu.memory_space<vmem>>) attributes {dimension_semantics = [#tpu.dimension_semantics<parallel>, #tpu.dimension_semantics<arbitrary>], iteration_bounds = array<i64: 1, 1>, scalar_prefetch = 2 : i64, scratch_operands = 1 : i64, tpu.core_type = #tpu.core_type<tc>, window_params = [{transform_indices = @transform_0, window_bounds = array<i64: 2, 8, 8, 128>}, {transform_indices = @transform_1, window_bounds = array<i64: 2, 8, 8, 128>}]} {
    %c0_i32 = arith.constant 0 : i32
    %0 = arith.cmpi eq, %arg1, %c0_i32 : i32
    %1 = arith.extui %0 : i1 to i32
    %c0_i32_0 = arith.constant 0 : i32
    %2 = arith.cmpi ne, %1, %c0_i32_0 : i32
    scf.if %2 {
      %cst_94 = arith.constant 0.000000e+00 : f32
      %165 = vector.broadcast %cst_94 : f32 to vector<2x8x128xf32>
      %c0_95 = arith.constant 0 : index
      %c0_96 = arith.constant 0 : index
      %c0_97 = arith.constant 0 : index
      %166 = vector.load %arg6[%c0_95, %c0_96, %c0_97] : memref<2x8x128xf32, #tpu.memory_space<vmem>>, vector<2x8x128xf32>
      tpu.vector_store %arg6[%c0_95, %c0_96, %c0_97], %165 {strides = array<i32>} : memref<2x8x128xf32, #tpu.memory_space<vmem>>, vector<2x8x128xf32>,
    } else {
    }
    %c0 = arith.constant 0 : index
    %c0_1 = arith.constant 0 : index
    %c0_2 = arith.constant 0 : index
    %3 = vector.load %arg6[%c0, %c0_1, %c0_2] : memref<2x8x128xf32, #tpu.memory_space<vmem>>, vector<2x8x128xf32>
    %c8_i32 = arith.constant 8 : i32
    %4 = arith.muli %arg1, %c8_i32 : i32
    %c0_i32_3 = arith.constant 0 : i32
    %5 = arith.addi %4, %c0_i32_3 : i32
    %c0_4 = arith.constant 0 : index
    %c0_5 = arith.constant 0 : index
    %c0_6 = arith.constant 0 : index
    %c0_7 = arith.constant 0 : index
    %6 = vector.load %arg4[%c0_4, %c0_5, %c0_6, %c0_7] : memref<2x8x8x128xf32, #tpu.memory_space<vmem>>, vector<2x1x8x128xf32>
    %7 = vector.shape_cast %6 : vector<2x1x8x128xf32> to vector<2x8x128xf32>
    %8 = arith.addf %3, %7 : vector<2x8x128xf32>
    %9 = arith.index_cast %5 : i32 to index
    %10 = memref.load %arg2[%9] : memref<8xf32, #tpu.memory_space<smem>>
    %cst = arith.constant 8.000000e+00 : f32
    %11 = arith.mulf %10, %cst : f32
    %12 = arith.index_cast %5 : i32 to index
    %13 = memref.load %arg3[%12] : memref<8xf32, #tpu.memory_space<smem>>
    %cst_8 = arith.constant 8.000000e+00 : f32
    %14 = arith.mulf %13, %cst_8 : f32
    %15 = vector.broadcast %11 : f32 to vector<2x8x128xf32>
    %16 = arith.cmpf oge, %8, %15 : vector<2x8x128xf32>
    %cst_9 = arith.constant 0.000000e+00 : f32
    %17 = vector.broadcast %14 : f32 to vector<2x8x128xf32>
    %18 = vector.broadcast %cst_9 : f32 to vector<2x8x128xf32>
    %19 = arith.select %16, %17, %18 : vector<2x8x128xi1>, vector<2x8x128xf32>
    %c0_10 = arith.constant 0 : index
    %c0_11 = arith.constant 0 : index
    %c0_12 = arith.constant 0 : index
    %c0_13 = arith.constant 0 : index
    %20 = vector.load %arg5[%c0_10, %c0_11, %c0_12, %c0_13] : memref<2x8x8x128xf32, #tpu.memory_space<vmem>>, vector<2x1x8x128xf32>
    %21 = vector.shape_cast %20 : vector<2x1x8x128xf32> to vector<2x8x128xf32>
    %22 = vector.shape_cast %19 : vector<2x8x128xf32> to vector<2x1x8x128xf32>
    tpu.vector_store %arg5[%c0_10, %c0_11, %c0_12, %c0_13], %22 {strides = array<i32>} : memref<2x8x8x128xf32, #tpu.memory_space<vmem>>, vector<2x1x8x128xf32>,
    %23 = arith.subf %8, %19 : vector<2x8x128xf32>
    %c8_i32_14 = arith.constant 8 : i32
    %24 = arith.muli %arg1, %c8_i32_14 : i32
    %c1_i32 = arith.constant 1 : i32
    %25 = arith.addi %24, %c1_i32 : i32
    %c0_15 = arith.constant 0 : index
    %c1 = arith.constant 1 : index
    %c0_16 = arith.constant 0 : index
    %c0_17 = arith.constant 0 : index
    %26 = vector.load %arg4[%c0_15, %c1, %c0_16, %c0_17] : memref<2x8x8x128xf32, #tpu.memory_space<vmem>>, vector<2x1x8x128xf32>
    %27 = vector.shape_cast %26 : vector<2x1x8x128xf32> to vector<2x8x128xf32>
    %28 = arith.addf %23, %27 : vector<2x8x128xf32>
    %29 = arith.index_cast %25 : i32 to index
    %30 = memref.load %arg2[%29] : memref<8xf32, #tpu.memory_space<smem>>
    %cst_18 = arith.constant 8.000000e+00 : f32
    %31 = arith.mulf %30, %cst_18 : f32
    %32 = arith.index_cast %25 : i32 to index
    %33 = memref.load %arg3[%32] : memref<8xf32, #tpu.memory_space<smem>>
    %cst_19 = arith.constant 8.000000e+00 : f32
    %34 = arith.mulf %33, %cst_19 : f32
    %35 = vector.broadcast %31 : f32 to vector<2x8x128xf32>
    %36 = arith.cmpf oge, %28, %35 : vector<2x8x128xf32>
    %cst_20 = arith.constant 0.000000e+00 : f32
    %37 = vector.broadcast %34 : f32 to vector<2x8x128xf32>
    %38 = vector.broadcast %cst_20 : f32 to vector<2x8x128xf32>
    %39 = arith.select %36, %37, %38 : vector<2x8x128xi1>, vector<2x8x128xf32>
    %c0_21 = arith.constant 0 : index
    %c1_22 = arith.constant 1 : index
    %c0_23 = arith.constant 0 : index
    %c0_24 = arith.constant 0 : index
    %40 = vector.load %arg5[%c0_21, %c1_22, %c0_23, %c0_24] : memref<2x8x8x128xf32, #tpu.memory_space<vmem>>, vector<2x1x8x128xf32>
    %41 = vector.shape_cast %40 : vector<2x1x8x128xf32> to vector<2x8x128xf32>
    %42 = vector.shape_cast %39 : vector<2x8x128xf32> to vector<2x1x8x128xf32>
    tpu.vector_store %arg5[%c0_21, %c1_22, %c0_23, %c0_24], %42 {strides = array<i32>} : memref<2x8x8x128xf32, #tpu.memory_space<vmem>>, vector<2x1x8x128xf32>,
    %43 = arith.subf %28, %39 : vector<2x8x128xf32>
    %c8_i32_25 = arith.constant 8 : i32
    %44 = arith.muli %arg1, %c8_i32_25 : i32
    %c2_i32 = arith.constant 2 : i32
    %45 = arith.addi %44, %c2_i32 : i32
    %c0_26 = arith.constant 0 : index
    %c2 = arith.constant 2 : index
    %c0_27 = arith.constant 0 : index
    %c0_28 = arith.constant 0 : index
    %46 = vector.load %arg4[%c0_26, %c2, %c0_27, %c0_28] : memref<2x8x8x128xf32, #tpu.memory_space<vmem>>, vector<2x1x8x128xf32>
    %47 = vector.shape_cast %46 : vector<2x1x8x128xf32> to vector<2x8x128xf32>
    %48 = arith.addf %43, %47 : vector<2x8x128xf32>
    %49 = arith.index_cast %45 : i32 to index
    %50 = memref.load %arg2[%49] : memref<8xf32, #tpu.memory_space<smem>>
    %cst_29 = arith.constant 8.000000e+00 : f32
    %51 = arith.mulf %50, %cst_29 : f32
    %52 = arith.index_cast %45 : i32 to index
    %53 = memref.load %arg3[%52] : memref<8xf32, #tpu.memory_space<smem>>
    %cst_30 = arith.constant 8.000000e+00 : f32
    %54 = arith.mulf %53, %cst_30 : f32
    %55 = vector.broadcast %51 : f32 to vector<2x8x128xf32>
    %56 = arith.cmpf oge, %48, %55 : vector<2x8x128xf32>
    %cst_31 = arith.constant 0.000000e+00 : f32
    %57 = vector.broadcast %54 : f32 to vector<2x8x128xf32>
    %58 = vector.broadcast %cst_31 : f32 to vector<2x8x128xf32>
    %59 = arith.select %56, %57, %58 : vector<2x8x128xi1>, vector<2x8x128xf32>
    %c0_32 = arith.constant 0 : index
    %c2_33 = arith.constant 2 : index
    %c0_34 = arith.constant 0 : index
    %c0_35 = arith.constant 0 : index
    %60 = vector.load %arg5[%c0_32, %c2_33, %c0_34, %c0_35] : memref<2x8x8x128xf32, #tpu.memory_space<vmem>>, vector<2x1x8x128xf32>
    %61 = vector.shape_cast %60 : vector<2x1x8x128xf32> to vector<2x8x128xf32>
    %62 = vector.shape_cast %59 : vector<2x8x128xf32> to vector<2x1x8x128xf32>
    tpu.vector_store %arg5[%c0_32, %c2_33, %c0_34, %c0_35], %62 {strides = array<i32>} : memref<2x8x8x128xf32, #tpu.memory_space<vmem>>, vector<2x1x8x128xf32>,
    %63 = arith.subf %48, %59 : vector<2x8x128xf32>
    %c8_i32_36 = arith.constant 8 : i32
    %64 = arith.muli %arg1, %c8_i32_36 : i32
    %c3_i32 = arith.constant 3 : i32
    %65 = arith.addi %64, %c3_i32 : i32
    %c0_37 = arith.constant 0 : index
    %c3 = arith.constant 3 : index
    %c0_38 = arith.constant 0 : index
    %c0_39 = arith.constant 0 : index
    %66 = vector.load %arg4[%c0_37, %c3, %c0_38, %c0_39] : memref<2x8x8x128xf32, #tpu.memory_space<vmem>>, vector<2x1x8x128xf32>
    %67 = vector.shape_cast %66 : vector<2x1x8x128xf32> to vector<2x8x128xf32>
    %68 = arith.addf %63, %67 : vector<2x8x128xf32>
    %69 = arith.index_cast %65 : i32 to index
    %70 = memref.load %arg2[%69] : memref<8xf32, #tpu.memory_space<smem>>
    %cst_40 = arith.constant 8.000000e+00 : f32
    %71 = arith.mulf %70, %cst_40 : f32
    %72 = arith.index_cast %65 : i32 to index
    %73 = memref.load %arg3[%72] : memref<8xf32, #tpu.memory_space<smem>>
    %cst_41 = arith.constant 8.000000e+00 : f32
    %74 = arith.mulf %73, %cst_41 : f32
    %75 = vector.broadcast %71 : f32 to vector<2x8x128xf32>
    %76 = arith.cmpf oge, %68, %75 : vector<2x8x128xf32>
    %cst_42 = arith.constant 0.000000e+00 : f32
    %77 = vector.broadcast %74 : f32 to vector<2x8x128xf32>
    %78 = vector.broadcast %cst_42 : f32 to vector<2x8x128xf32>
    %79 = arith.select %76, %77, %78 : vector<2x8x128xi1>, vector<2x8x128xf32>
    %c0_43 = arith.constant 0 : index
    %c3_44 = arith.constant 3 : index
    %c0_45 = arith.constant 0 : index
    %c0_46 = arith.constant 0 : index
    %80 = vector.load %arg5[%c0_43, %c3_44, %c0_45, %c0_46] : memref<2x8x8x128xf32, #tpu.memory_space<vmem>>, vector<2x1x8x128xf32>
    %81 = vector.shape_cast %80 : vector<2x1x8x128xf32> to vector<2x8x128xf32>
    %82 = vector.shape_cast %79 : vector<2x8x128xf32> to vector<2x1x8x128xf32>
    tpu.vector_store %arg5[%c0_43, %c3_44, %c0_45, %c0_46], %82 {strides = array<i32>} : memref<2x8x8x128xf32, #tpu.memory_space<vmem>>, vector<2x1x8x128xf32>,
    %83 = arith.subf %68, %79 : vector<2x8x128xf32>
    %c8_i32_47 = arith.constant 8 : i32
    %84 = arith.muli %arg1, %c8_i32_47 : i32
    %c4_i32 = arith.constant 4 : i32
    %85 = arith.addi %84, %c4_i32 : i32
    %c0_48 = arith.constant 0 : index
    %c4 = arith.constant 4 : index
    %c0_49 = arith.constant 0 : index
    %c0_50 = arith.constant 0 : index
    %86 = vector.load %arg4[%c0_48, %c4, %c0_49, %c0_50] : memref<2x8x8x128xf32, #tpu.memory_space<vmem>>, vector<2x1x8x128xf32>
    %87 = vector.shape_cast %86 : vector<2x1x8x128xf32> to vector<2x8x128xf32>
    %88 = arith.addf %83, %87 : vector<2x8x128xf32>
    %89 = arith.index_cast %85 : i32 to index
    %90 = memref.load %arg2[%89] : memref<8xf32, #tpu.memory_space<smem>>
    %cst_51 = arith.constant 8.000000e+00 : f32
    %91 = arith.mulf %90, %cst_51 : f32
    %92 = arith.index_cast %85 : i32 to index
    %93 = memref.load %arg3[%92] : memref<8xf32, #tpu.memory_space<smem>>
    %cst_52 = arith.constant 8.000000e+00 : f32
    %94 = arith.mulf %93, %cst_52 : f32
    %95 = vector.broadcast %91 : f32 to vector<2x8x128xf32>
    %96 = arith.cmpf oge, %88, %95 : vector<2x8x128xf32>
    %cst_53 = arith.constant 0.000000e+00 : f32
    %97 = vector.broadcast %94 : f32 to vector<2x8x128xf32>
    %98 = vector.broadcast %cst_53 : f32 to vector<2x8x128xf32>
    %99 = arith.select %96, %97, %98 : vector<2x8x128xi1>, vector<2x8x128xf32>
    %c0_54 = arith.constant 0 : index
    %c4_55 = arith.constant 4 : index
    %c0_56 = arith.constant 0 : index
    %c0_57 = arith.constant 0 : index
    %100 = vector.load %arg5[%c0_54, %c4_55, %c0_56, %c0_57] : memref<2x8x8x128xf32, #tpu.memory_space<vmem>>, vector<2x1x8x128xf32>
    %101 = vector.shape_cast %100 : vector<2x1x8x128xf32> to vector<2x8x128xf32>
    %102 = vector.shape_cast %99 : vector<2x8x128xf32> to vector<2x1x8x128xf32>
    tpu.vector_store %arg5[%c0_54, %c4_55, %c0_56, %c0_57], %102 {strides = array<i32>} : memref<2x8x8x128xf32, #tpu.memory_space<vmem>>, vector<2x1x8x128xf32>,
    %103 = arith.subf %88, %99 : vector<2x8x128xf32>
    %c8_i32_58 = arith.constant 8 : i32
    %104 = arith.muli %arg1, %c8_i32_58 : i32
    %c5_i32 = arith.constant 5 : i32
    %105 = arith.addi %104, %c5_i32 : i32
    %c0_59 = arith.constant 0 : index
    %c5 = arith.constant 5 : index
    %c0_60 = arith.constant 0 : index
    %c0_61 = arith.constant 0 : index
    %106 = vector.load %arg4[%c0_59, %c5, %c0_60, %c0_61] : memref<2x8x8x128xf32, #tpu.memory_space<vmem>>, vector<2x1x8x128xf32>
    %107 = vector.shape_cast %106 : vector<2x1x8x128xf32> to vector<2x8x128xf32>
    %108 = arith.addf %103, %107 : vector<2x8x128xf32>
    %109 = arith.index_cast %105 : i32 to index
    %110 = memref.load %arg2[%109] : memref<8xf32, #tpu.memory_space<smem>>
    %cst_62 = arith.constant 8.000000e+00 : f32
    %111 = arith.mulf %110, %cst_62 : f32
    %112 = arith.index_cast %105 : i32 to index
    %113 = memref.load %arg3[%112] : memref<8xf32, #tpu.memory_space<smem>>
    %cst_63 = arith.constant 8.000000e+00 : f32
    %114 = arith.mulf %113, %cst_63 : f32
    %115 = vector.broadcast %111 : f32 to vector<2x8x128xf32>
    %116 = arith.cmpf oge, %108, %115 : vector<2x8x128xf32>
    %cst_64 = arith.constant 0.000000e+00 : f32
    %117 = vector.broadcast %114 : f32 to vector<2x8x128xf32>
    %118 = vector.broadcast %cst_64 : f32 to vector<2x8x128xf32>
    %119 = arith.select %116, %117, %118 : vector<2x8x128xi1>, vector<2x8x128xf32>
    %c0_65 = arith.constant 0 : index
    %c5_66 = arith.constant 5 : index
    %c0_67 = arith.constant 0 : index
    %c0_68 = arith.constant 0 : index
    %120 = vector.load %arg5[%c0_65, %c5_66, %c0_67, %c0_68] : memref<2x8x8x128xf32, #tpu.memory_space<vmem>>, vector<2x1x8x128xf32>
    %121 = vector.shape_cast %120 : vector<2x1x8x128xf32> to vector<2x8x128xf32>
    %122 = vector.shape_cast %119 : vector<2x8x128xf32> to vector<2x1x8x128xf32>
    tpu.vector_store %arg5[%c0_65, %c5_66, %c0_67, %c0_68], %122 {strides = array<i32>} : memref<2x8x8x128xf32, #tpu.memory_space<vmem>>, vector<2x1x8x128xf32>,
    %123 = arith.subf %108, %119 : vector<2x8x128xf32>
    %c8_i32_69 = arith.constant 8 : i32
    %124 = arith.muli %arg1, %c8_i32_69 : i32
    %c6_i32 = arith.constant 6 : i32
    %125 = arith.addi %124, %c6_i32 : i32
    %c0_70 = arith.constant 0 : index
    %c6 = arith.constant 6 : index
    %c0_71 = arith.constant 0 : index
    %c0_72 = arith.constant 0 : index
    %126 = vector.load %arg4[%c0_70, %c6, %c0_71, %c0_72] : memref<2x8x8x128xf32, #tpu.memory_space<vmem>>, vector<2x1x8x128xf32>
    %127 = vector.shape_cast %126 : vector<2x1x8x128xf32> to vector<2x8x128xf32>
    %128 = arith.addf %123, %127 : vector<2x8x128xf32>
    %129 = arith.index_cast %125 : i32 to index
    %130 = memref.load %arg2[%129] : memref<8xf32, #tpu.memory_space<smem>>
    %cst_73 = arith.constant 8.000000e+00 : f32
    %131 = arith.mulf %130, %cst_73 : f32
    %132 = arith.index_cast %125 : i32 to index
    %133 = memref.load %arg3[%132] : memref<8xf32, #tpu.memory_space<smem>>
    %cst_74 = arith.constant 8.000000e+00 : f32
    %134 = arith.mulf %133, %cst_74 : f32
    %135 = vector.broadcast %131 : f32 to vector<2x8x128xf32>
    %136 = arith.cmpf oge, %128, %135 : vector<2x8x128xf32>
    %cst_75 = arith.constant 0.000000e+00 : f32
    %137 = vector.broadcast %134 : f32 to vector<2x8x128xf32>
    %138 = vector.broadcast %cst_75 : f32 to vector<2x8x128xf32>
    %139 = arith.select %136, %137, %138 : vector<2x8x128xi1>, vector<2x8x128xf32>
    %c0_76 = arith.constant 0 : index
    %c6_77 = arith.constant 6 : index
    %c0_78 = arith.constant 0 : index
    %c0_79 = arith.constant 0 : index
    %140 = vector.load %arg5[%c0_76, %c6_77, %c0_78, %c0_79] : memref<2x8x8x128xf32, #tpu.memory_space<vmem>>, vector<2x1x8x128xf32>
    %141 = vector.shape_cast %140 : vector<2x1x8x128xf32> to vector<2x8x128xf32>
    %142 = vector.shape_cast %139 : vector<2x8x128xf32> to vector<2x1x8x128xf32>
    tpu.vector_store %arg5[%c0_76, %c6_77, %c0_78, %c0_79], %142 {strides = array<i32>} : memref<2x8x8x128xf32, #tpu.memory_space<vmem>>, vector<2x1x8x128xf32>,
    %143 = arith.subf %128, %139 : vector<2x8x128xf32>
    %c8_i32_80 = arith.constant 8 : i32
    %144 = arith.muli %arg1, %c8_i32_80 : i32
    %c7_i32 = arith.constant 7 : i32
    %145 = arith.addi %144, %c7_i32 : i32
    %c0_81 = arith.constant 0 : index
    %c7 = arith.constant 7 : index
    %c0_82 = arith.constant 0 : index
    %c0_83 = arith.constant 0 : index
    %146 = vector.load %arg4[%c0_81, %c7, %c0_82, %c0_83] : memref<2x8x8x128xf32, #tpu.memory_space<vmem>>, vector<2x1x8x128xf32>
    %147 = vector.shape_cast %146 : vector<2x1x8x128xf32> to vector<2x8x128xf32>
    %148 = arith.addf %143, %147 : vector<2x8x128xf32>
    %149 = arith.index_cast %145 : i32 to index
    %150 = memref.load %arg2[%149] : memref<8xf32, #tpu.memory_space<smem>>
    %cst_84 = arith.constant 8.000000e+00 : f32
    %151 = arith.mulf %150, %cst_84 : f32
    %152 = arith.index_cast %145 : i32 to index
    %153 = memref.load %arg3[%152] : memref<8xf32, #tpu.memory_space<smem>>
    %cst_85 = arith.constant 8.000000e+00 : f32
    %154 = arith.mulf %153, %cst_85 : f32
    %155 = vector.broadcast %151 : f32 to vector<2x8x128xf32>
    %156 = arith.cmpf oge, %148, %155 : vector<2x8x128xf32>
    %cst_86 = arith.constant 0.000000e+00 : f32
    %157 = vector.broadcast %154 : f32 to vector<2x8x128xf32>
    %158 = vector.broadcast %cst_86 : f32 to vector<2x8x128xf32>
    %159 = arith.select %156, %157, %158 : vector<2x8x128xi1>, vector<2x8x128xf32>
    %c0_87 = arith.constant 0 : index
    %c7_88 = arith.constant 7 : index
    %c0_89 = arith.constant 0 : index
    %c0_90 = arith.constant 0 : index
    %160 = vector.load %arg5[%c0_87, %c7_88, %c0_89, %c0_90] : memref<2x8x8x128xf32, #tpu.memory_space<vmem>>, vector<2x1x8x128xf32>
    %161 = vector.shape_cast %160 : vector<2x1x8x128xf32> to vector<2x8x128xf32>
    %162 = vector.shape_cast %159 : vector<2x8x128xf32> to vector<2x1x8x128xf32>
    tpu.vector_store %arg5[%c0_87, %c7_88, %c0_89, %c0_90], %162 {strides = array<i32>} : memref<2x8x8x128xf32, #tpu.memory_space<vmem>>, vector<2x1x8x128xf32>,
    %163 = arith.subf %148, %159 : vector<2x8x128xf32>
    %c0_91 = arith.constant 0 : index
    %c0_92 = arith.constant 0 : index
    %c0_93 = arith.constant 0 : index
    %164 = vector.load %arg6[%c0_91, %c0_92, %c0_93] : memref<2x8x128xf32, #tpu.memory_space<vmem>>, vector<2x8x128xf32>
    tpu.vector_store %arg6[%c0_91, %c0_92, %c0_93], %163 {strides = array<i32>} : memref<2x8x128xf32, #tpu.memory_space<vmem>>, vector<2x8x128xf32>,
    return
  }
  func.func @transform_0(%arg0: i32, %arg1: i32, %arg2: memref<8xf32, #tpu.memory_space<smem>>, %arg3: memref<8xf32, #tpu.memory_space<smem>>) -> (i32, i32, i32, i32) {
    %c0_i32 = arith.constant 0 : i32
    %c0_i32_0 = arith.constant 0 : i32
    %c0_i32_1 = arith.constant 0 : i32
    return %c0_i32, %arg1, %arg0, %c0_i32_0 : i32, i32, i32, i32
  }
  func.func @transform_1(%arg0: i32, %arg1: i32, %arg2: memref<8xf32, #tpu.memory_space<smem>>, %arg3: memref<8xf32, #tpu.memory_space<smem>>) -> (i32, i32, i32, i32) {
    %c0_i32 = arith.constant 0 : i32
    %c0_i32_0 = arith.constant 0 : i32
    %c0_i32_1 = arith.constant 0 : i32
    return %c0_i32, %arg1, %arg0, %c0_i32_0 : i32, i32, i32, i32
  }
}

</mosaic_0001>

<llo_original>
// kernel: tpu_custom_call.1
$region0: #{tpu_custom_call.1}
  #allocation0 [shape = 'u32[]', space=smem, size = 0x4, offset = 0x4, fixed_abs, tag = 'smem constant byte address 0x4 - core index']
  #allocation1 [shape = 'u32[144,128]{1,0:T(1,128)}', space=vmem, size = 0x12000, scoped, tag = 'internal scratch']
  #allocation2 [shape = 'f32[2,8,128]{2,1,0:T(8,128)}', space=vmem, size = 0x2000, scoped, tag = 'scratch operand']
  #allocation3 [shape = 's32[1]{0}', space=sflag, size = 0x4, scoped, tag = 'scoped memory for tpu_custom_call.1']
  #allocation4 [shape = 'u8[512]{0}', space=smem, size = 0x200, scoped, tag = 'prefetched SMEM operand 0']
  #allocation5 [shape = 'u8[512]{0}', space=smem, size = 0x200, scoped, tag = 'prefetched SMEM operand 1']
  %s0 = inlined_call_operand.hbm [shape: f32[8], index: 0, kind: input, shape index: {}]
  %s1 = inlined_call_operand.vmem [shape: f32[8], index: 1, kind: input, shape index: {}]
  %s2 = inlined_call_operand.hbm [shape: f32[2,8,8,128], index: 2, kind: input, shape index: {}]
  %s3 = inlined_call_operand.hbm [shape: f32[2,8,8,128], index: 3, kind: output, shape index: {}]
  %s4 = sld [smem:[#allocation0]]
  $region22: #{tpu_custom_call.1} parent=0
    _
  %s6 = ssub.s32 1, %s4
  %s7 = scalar_select 0, %s6, %s4
  %9 = dma.hbm_to_smem %s0, 16, [#allocation4], [#allocation3]
  %s10 = sshll.u32 %s1, 4
  %s11 = int_to_ptr.vmem [resolvable:$true] %s10
  %13 = dma.vmem_to_smem %s11, 16, [#allocation5], [#allocation3]
  %14 = dma.done [#allocation3], 32
  %15 = sfence
  $region1: #{tpu_custom_call.1} parent=0
    #allocation6 [shape = 'u8[65536]{0}', space=vmem, size = 0x10000, scoped, tag = 'input window, operand 2, single buffered']
    #allocation7 [shape = 's32[1]{0}', space=sflag, size = 0x4, scoped, tag = 'scoped memory for tpu_custom_call.1']
    #allocation8 [shape = 's32[1]{0}', space=sflag, size = 0x4, scoped, tag = 'scoped memory for tpu_custom_call.1']
    #allocation9 [shape = 'u8[65536]{0}', space=vmem, size = 0x10000, scoped, tag = 'output window, operand 0, single buffered']
    %16 = vsyncpa [#allocation7], 0
    %17 = vsyncpa [#allocation8], 0
    // Predicated region
    $region2: #{tpu_custom_call.1} parent=1 // pred_check
      _
    $region3: #{tpu_custom_call.1} parent=1 // pred_check_branch
      %19 = sbr.rel (0) target = $region5
    $region4: #{tpu_custom_call.1} parent=1 // pred_region
      %s21 = ssub.s32 2048, 2048
      %22 = vsyncadd [#allocation7], %s21
      %s23 = sshll.u32 [#allocation6], 4
      %s24 = int_to_ptr.vmem [resolvable:$true] %s23
      %29 = dma.hbm_to_vmem [thread:$0]  %s2, 2048, %s24, [#allocation7], 128, 128, 8
    $region5: #{tpu_custom_call.1} parent=1 // pred_fallthru
      _
    // Predicated region
    $region6: #{tpu_custom_call.1} parent=1 // pred_check
      _
    $region7: #{tpu_custom_call.1} parent=1 // pred_check_branch
      %31 = sbr.rel (0) target = $region9
    $region8: #{tpu_custom_call.1} parent=1 // pred_region
      %32 = dma.done [#allocation7], 2048
    $region9: #{tpu_custom_call.1} parent=1 // pred_fallthru
      _
    %p33 = scmp.eq.s32.totalorder 0, 0
    // Predicated region
    $region10: #{tpu_custom_call.1} parent=1 // pred_check
      %p34 = pneg %p33
    $region11: #{tpu_custom_call.1} parent=1 // pred_check_branch
      %36 = sbr.rel (%p34) target = $region13
    $region12: #{tpu_custom_call.1} parent=1 // pred_region
      %37 = vst [vmem:[#allocation2] sm:$0xff] 0.0
      %38 = vst [vmem:[#allocation2 + $0x8] sm:$0xff] 0.0
    $region13: #{tpu_custom_call.1} parent=1 // pred_fallthru
      _
    %v39 = vld [vmem:[#allocation2] sm:$0xff]
    %v40 = vld [vmem:[#allocation2 + $0x8] sm:$0xff]
    %s41 = smul.u32 0, 8
    %v42 = vld [vmem:[#allocation6] sm:$0xff]
    %v43 = vld [vmem:[#allocation6 + $0x40] sm:$0xff]
    %v44 = vadd.f32 %v39, %v42
    %v45 = vadd.f32 %v40, %v43
    %s46 = sld [smem:[#allocation4 + %s41]]
    %s47 = smul.f32 %s46, 8.0
    %s48 = sld [smem:[#allocation5 + %s41]]
    %s49 = smul.f32 %s48, 8.0
    %v50 = vstv %s47
    %vm51 = vcmp.ge.f32.partialorder %v44, %v50
    %vm52 = vcmp.ge.f32.partialorder %v45, %v50
    %v53 = vstv %s49
    %v54 = vsel %vm51, %v53, 0.0
    %v55 = vsel %vm52, %v53, 0.0
    %56 = vst [vmem:[#allocation9] sm:$0xff] %v54
    %57 = vst [vmem:[#allocation9 + $0x40] sm:$0xff] %v55
    %v58 = vsub.f32 %v44, %v54
    %v59 = vsub.f32 %v45, %v55
    %s60 = sadd.s32 %s41, 1
    %s61 = scalar_lea.vmem [#allocation6], 8
    %v62 = vld [vmem:[%s61] sm:$0xff]
    %v63 = vld [vmem:[%s61 + $0x40] sm:$0xff]
    %v64 = vadd.f32 %v58, %v62
    %v65 = vadd.f32 %v59, %v63
    %s66 = sld [smem:[#allocation4 + %s60]]
    %s67 = smul.f32 %s66, 8.0
    %s68 = sld [smem:[#allocation5 + %s60]]
    %s69 = smul.f32 %s68, 8.0
    %v70 = vstv %s67
    %vm71 = vcmp.ge.f32.partialorder %v64, %v70
    %vm72 = vcmp.ge.f32.partialorder %v65, %v70
    %v73 = vstv %s69
    %v74 = vsel %vm71, %v73, 0.0
    %v75 = vsel %vm72, %v73, 0.0
    %s76 = scalar_lea.vmem [#allocation9], 8
    %77 = vst [vmem:[%s76] sm:$0xff] %v74
    %78 = vst [vmem:[%s76 + $0x40] sm:$0xff] %v75
    %v79 = vsub.f32 %v64, %v74
    %v80 = vsub.f32 %v65, %v75
    %s81 = sadd.s32 %s41, 2
    %s82 = scalar_lea.vmem [#allocation6], 16
    %v83 = vld [vmem:[%s82] sm:$0xff]
    %v84 = vld [vmem:[%s82 + $0x40] sm:$0xff]
    %v85 = vadd.f32 %v79, %v83
    %v86 = vadd.f32 %v80, %v84
    %s87 = sld [smem:[#allocation4 + %s81]]
    %s88 = smul.f32 %s87, 8.0
    %s89 = sld [smem:[#allocation5 + %s81]]
    %s90 = smul.f32 %s89, 8.0
    %v91 = vstv %s88
    %vm92 = vcmp.ge.f32.partialorder %v85, %v91
    %vm93 = vcmp.ge.f32.partialorder %v86, %v91
    %v94 = vstv %s90
    %v95 = vsel %vm92, %v94, 0.0
    %v96 = vsel %vm93, %v94, 0.0
    %s97 = scalar_lea.vmem [#allocation9], 16
    %98 = vst [vmem:[%s97] sm:$0xff] %v95
    %99 = vst [vmem:[%s97 + $0x40] sm:$0xff] %v96
    %v100 = vsub.f32 %v85, %v95
    %v101 = vsub.f32 %v86, %v96
    %s102 = sadd.s32 %s41, 3
    %s103 = scalar_lea.vmem [#allocation6], 24
    %v104 = vld [vmem:[%s103] sm:$0xff]
    %v105 = vld [vmem:[%s103 + $0x40] sm:$0xff]
    %v106 = vadd.f32 %v100, %v104
    %v107 = vadd.f32 %v101, %v105
    %s108 = sld [smem:[#allocation4 + %s102]]
    %s109 = smul.f32 %s108, 8.0
    %s110 = sld [smem:[#allocation5 + %s102]]
    %s111 = smul.f32 %s110, 8.0
    %v112 = vstv %s109
    %vm113 = vcmp.ge.f32.partialorder %v106, %v112
    %vm114 = vcmp.ge.f32.partialorder %v107, %v112
    %v115 = vstv %s111
    %v116 = vsel %vm113, %v115, 0.0
    %v117 = vsel %vm114, %v115, 0.0
    %s118 = scalar_lea.vmem [#allocation9], 24
    %119 = vst [vmem:[%s118] sm:$0xff] %v116
    %120 = vst [vmem:[%s118 + $0x40] sm:$0xff] %v117
    %v121 = vsub.f32 %v106, %v116
    %v122 = vsub.f32 %v107, %v117
    %s123 = sadd.s32 %s41, 4
    %s124 = scalar_lea.vmem [#allocation6], 32
    %v125 = vld [vmem:[%s124] sm:$0xff]
    %v126 = vld [vmem:[%s124 + $0x40] sm:$0xff]
    %v127 = vadd.f32 %v121, %v125
    %v128 = vadd.f32 %v122, %v126
    %s129 = sld [smem:[#allocation4 + %s123]]
    %s130 = smul.f32 %s129, 8.0
    %s131 = sld [smem:[#allocation5 + %s123]]
    %s132 = smul.f32 %s131, 8.0
    %v133 = vstv %s130
    %vm134 = vcmp.ge.f32.partialorder %v127, %v133
    %vm135 = vcmp.ge.f32.partialorder %v128, %v133
    %v136 = vstv %s132
    %v137 = vsel %vm134, %v136, 0.0
    %v138 = vsel %vm135, %v136, 0.0
    %s139 = scalar_lea.vmem [#allocation9], 32
    %140 = vst [vmem:[%s139] sm:$0xff] %v137
    %141 = vst [vmem:[%s139 + $0x40] sm:$0xff] %v138
    %v142 = vsub.f32 %v127, %v137
    %v143 = vsub.f32 %v128, %v138
    %s144 = sadd.s32 %s41, 5
    %s145 = scalar_lea.vmem [#allocation6], 40
    %v146 = vld [vmem:[%s145] sm:$0xff]
    %v147 = vld [vmem:[%s145 + $0x40] sm:$0xff]
    %v148 = vadd.f32 %v142, %v146
    %v149 = vadd.f32 %v143, %v147
    %s150 = sld [smem:[#allocation4 + %s144]]
    %s151 = smul.f32 %s150, 8.0
    %s152 = sld [smem:[#allocation5 + %s144]]
    %s153 = smul.f32 %s152, 8.0
    %v154 = vstv %s151
    %vm155 = vcmp.ge.f32.partialorder %v148, %v154
    %vm156 = vcmp.ge.f32.partialorder %v149, %v154
    %v157 = vstv %s153
    %v158 = vsel %vm155, %v157, 0.0
    %v159 = vsel %vm156, %v157, 0.0
    %s160 = scalar_lea.vmem [#allocation9], 40
    %161 = vst [vmem:[%s160] sm:$0xff] %v158
    %162 = vst [vmem:[%s160 + $0x40] sm:$0xff] %v159
    %v163 = vsub.f32 %v148, %v158
    %v164 = vsub.f32 %v149, %v159
    %s165 = sadd.s32 %s41, 6
    %s166 = scalar_lea.vmem [#allocation6], 48
    %v167 = vld [vmem:[%s166] sm:$0xff]
    %v168 = vld [vmem:[%s166 + $0x40] sm:$0xff]
    %v169 = vadd.f32 %v163, %v167
    %v170 = vadd.f32 %v164, %v168
    %s171 = sld [smem:[#allocation4 + %s165]]
    %s172 = smul.f32 %s171, 8.0
    %s173 = sld [smem:[#allocation5 + %s165]]
    %s174 = smul.f32 %s173, 8.0
    %v175 = vstv %s172
    %vm176 = vcmp.ge.f32.partialorder %v169, %v175
    %vm177 = vcmp.ge.f32.partialorder %v170, %v175
    %v178 = vstv %s174
    %v179 = vsel %vm176, %v178, 0.0
    %v180 = vsel %vm177, %v178, 0.0
    %s181 = scalar_lea.vmem [#allocation9], 48
    %182 = vst [vmem:[%s181] sm:$0xff] %v179
    %183 = vst [vmem:[%s181 + $0x40] sm:$0xff] %v180
    %v184 = vsub.f32 %v169, %v179
    %v185 = vsub.f32 %v170, %v180
    %s186 = sadd.s32 %s41, 7
    %s187 = scalar_lea.vmem [#allocation6], 56
    %v188 = vld [vmem:[%s187] sm:$0xff]
    %v189 = vld [vmem:[%s187 + $0x40] sm:$0xff]
    %v190 = vadd.f32 %v184, %v188
    %v191 = vadd.f32 %v185, %v189
    %s192 = sld [smem:[#allocation4 + %s186]]
    %s193 = smul.f32 %s192, 8.0
    %s194 = sld [smem:[#allocation5 + %s186]]
    %s195 = smul.f32 %s194, 8.0
    %v196 = vstv %s193
    %vm197 = vcmp.ge.f32.partialorder %v190, %v196
    %vm198 = vcmp.ge.f32.partialorder %v191, %v196
    %v199 = vstv %s195
    %v200 = vsel %vm197, %v199, 0.0
    %v201 = vsel %vm198, %v199, 0.0
    %s202 = scalar_lea.vmem [#allocation9], 56
    %203 = vst [vmem:[%s202] sm:$0xff] %v200
    %204 = vst [vmem:[%s202 + $0x40] sm:$0xff] %v201
    %v205 = vsub.f32 %v190, %v200
    %v206 = vsub.f32 %v191, %v201
    %207 = vst [vmem:[#allocation2] sm:$0xff] %v205
    %208 = vst [vmem:[#allocation2 + $0x8] sm:$0xff] %v206
    // Predicated region
    $region14: #{tpu_custom_call.1} parent=1 // pred_check
      _
    $region15: #{tpu_custom_call.1} parent=1 // pred_check_branch
      %210 = sbr.rel (0) target = $region17
    $region16: #{tpu_custom_call.1} parent=1 // pred_region
      %s212 = ssub.s32 2048, 2048
      %213 = vsyncadd [#allocation8], %s212
      %s214 = sshll.u32 [#allocation9], 4
      %s215 = int_to_ptr.vmem [resolvable:$true] %s214
      %220 = dma.vmem_to_hbm [thread:$0]  %s215, 2048, %s3, [#allocation8], 128, 128, 8
    $region17: #{tpu_custom_call.1} parent=1 // pred_fallthru
      _
    // Predicated region
    $region18: #{tpu_custom_call.1} parent=1 // pred_check
      _
    $region19: #{tpu_custom_call.1} parent=1 // pred_check_branch
      %222 = sbr.rel (0) target = $region21
    $region20: #{tpu_custom_call.1} parent=1 // pred_region
      %223 = dma.done [#allocation8], 2048
    $region21: #{tpu_custom_call.1} parent=1 // pred_fallthru
      _
    %224 = vsyncpa [#allocation7], 1
    %225 = vsyncpa [#allocation8], 1

</llo_original>
